<compile_context>
chip_gen: v7x
topology: tpu7x:2x2x1
jax: 0.10.0
libtpu: 0.0.40
codegen_flags: <defaults>
</compile_context>

<pallas_src>
import jax
import jax.numpy as jnp
from jax.experimental import pallas as pl
from jax.experimental.pallas import tpu as pltpu


def _round_up(a, m):
    return (a + m - 1) // m * m


def mlp_kernel(x_ref, w1_ref, b1_ref, w2_ref, b2_ref,
               w3_ref, b3_ref, w4_ref, b4_ref, o_ref):
    # fc1 + ReLU   (bf16 operands on the MXU, f32 accumulation / epilogue)
    h = jnp.dot(x_ref[...], w1_ref[...], preferred_element_type=jnp.float32)
    h = jnp.maximum(h + b1_ref[...], 0.0)
    # (dropout = identity in eval mode)
    # fc2 + ReLU
    h = jnp.dot(h.astype(jnp.bfloat16), w2_ref[...],
                preferred_element_type=jnp.float32)
    h = jnp.maximum(h + b2_ref[...], 0.0)
    # fc3 + ReLU
    h = jnp.dot(h.astype(jnp.bfloat16), w3_ref[...],
                preferred_element_type=jnp.float32)
    h = jnp.maximum(h + b3_ref[...], 0.0)
    # fc4 (no activation). Padded class columns carry zero weights and a huge
    # negative bias, so they vanish from the softmax normalizer below.
    z = jnp.dot(h.astype(jnp.bfloat16), w4_ref[...],
                preferred_element_type=jnp.float32)
    z = z + b4_ref[...]
    # log_softmax over last dim (numerically stable, f32)
    m = jnp.max(z, axis=-1, keepdims=True)
    lse = m + jnp.log(jnp.sum(jnp.exp(z - m), axis=-1, keepdims=True))
    o_ref[...] = (z - lse).astype(o_ref.dtype)


def mlp_forward(x, params, *, tile_b=None):
    """x: (B, input_size) float32. params: dict of transposed weights + biases."""
    B, in_dim = x.shape
    hid = params["w1"].shape[1]
    ncls = params["w4"].shape[1]

    # Lane-dense output block: pad classes up to a multiple of 128.
    ncls_p = _round_up(ncls, 128)

    # Large batch tile to amortize grid-step overhead and fill MXU rows.
    if tile_b is None:
        tile_b = min(512, _round_up(B, 8))
    tile_b = _round_up(tile_b, 8)
    B_p = _round_up(B, tile_b)

    # --- pad / cast operands (wrapper-side, cheap XLA ops) ---
    x_p = x
    if B_p != B:
        x_p = jnp.pad(x, ((0, B_p - B), (0, 0)))
    x_p = x_p.astype(jnp.bfloat16)

    w1 = params["w1"].astype(jnp.bfloat16)
    w2 = params["w2"].astype(jnp.bfloat16)
    w3 = params["w3"].astype(jnp.bfloat16)
    w4 = params["w4"].astype(jnp.bfloat16)
    b1 = params["b1"].astype(jnp.float32)
    b2 = params["b2"].astype(jnp.float32)
    b3 = params["b3"].astype(jnp.float32)
    b4 = params["b4"].astype(jnp.float32)
    if ncls_p != ncls:
        w4 = jnp.pad(w4, ((0, 0), (0, ncls_p - ncls)))
        b4 = jnp.pad(b4, ((0, 0), (0, ncls_p - ncls)), constant_values=-1e30)

    grid = (B_p // tile_b,)

    def row_map(i):
        return (i, 0)

    def fixed_map(i):
        return (0, 0)

    in_specs = [
        pl.BlockSpec((tile_b, in_dim), row_map),          # x tile (bf16)
        pl.BlockSpec((in_dim, hid), fixed_map),           # w1
        pl.BlockSpec((1, hid), fixed_map),                # b1
        pl.BlockSpec((hid, hid), fixed_map),              # w2
        pl.BlockSpec((1, hid), fixed_map),                # b2
        pl.BlockSpec((hid, hid), fixed_map),              # w3
        pl.BlockSpec((1, hid), fixed_map),                # b3
        pl.BlockSpec((hid, ncls_p), fixed_map),           # w4 (lane-padded)
        pl.BlockSpec((1, ncls_p), fixed_map),             # b4 (lane-padded)
    ]
    out_spec = pl.BlockSpec((tile_b, ncls_p), row_map)

    # VMEM budget: double-buffered x/out tiles + resident weights + headroom.
    weight_bytes = (in_dim * hid + 2 * hid * hid + hid * ncls_p) * 2 \
                   + (3 * hid + ncls_p) * 4
    tile_bytes = tile_b * in_dim * 2 + tile_b * ncls_p * 4
    vmem_needed = 2 * (tile_bytes + weight_bytes) + 4 * tile_b * hid * 4
    vmem_limit = int(min(64 * 1024 * 1024,
                         max(32 * 1024 * 1024, 2 * vmem_needed)))

    cost = pl.CostEstimate(
        flops=2 * B_p * (in_dim * hid + 2 * hid * hid + hid * ncls_p),
        transcendentals=B_p * (ncls_p + 1),
        bytes_accessed=B_p * in_dim * 2 + weight_bytes + B_p * ncls_p * 4,
    )

    out_p = pl.pallas_call(
        mlp_kernel,
        out_shape=jax.ShapeDtypeStruct((B_p, ncls_p), jnp.float32),
        grid_spec=pltpu.PrefetchScalarGridSpec(
            num_scalar_prefetch=0,
            grid=grid,
            in_specs=in_specs,
            out_specs=out_spec,
        ),
        compiler_params=pltpu.CompilerParams(
            dimension_semantics=("parallel",),
            vmem_limit_bytes=vmem_limit,
        ),
        cost_estimate=cost,
    )(x_p, w1, b1, w2, b2, w3, b3, w4, b4)

    return out_p[:B, :ncls]


def init_params(key, input_size, hidden_size, num_classes):
    """Deterministic init mimicking torch.nn.Linear default (uniform ±1/sqrt(fan_in)).
    Weights are stored as (in_features, out_features)."""
    def linear(k, fan_in, fan_out):
        kw, kb = jax.random.split(k)
        bound = 1.0 / (fan_in ** 0.5)
        w = jax.random.uniform(kw, (fan_in, fan_out), jnp.float32, -bound, bound)
        b = jax.random.uniform(kb, (1, fan_out), jnp.float32, -bound, bound)
        return w, b

    k1, k2, k3, k4 = jax.random.split(key, 4)
    w1, b1 = linear(k1, input_size, hidden_size)
    w2, b2 = linear(k2, hidden_size, hidden_size)
    w3, b3 = linear(k3, hidden_size, hidden_size)
    w4, b4 = linear(k4, hidden_size, num_classes)
    return dict(w1=w1, b1=b1, w2=w2, b2=b2, w3=w3, b3=b3, w4=w4, b4=b4)


def mlp_reference(x, p, *, use_bf16=True):
    def dot(a, w):
        if use_bf16:
            a = a.astype(jnp.bfloat16)
            w = w.astype(jnp.bfloat16)
        return jnp.dot(a, w, preferred_element_type=jnp.float32)

    h = jax.nn.relu(dot(x, p["w1"]) + p["b1"])
    h = jax.nn.relu(dot(h, p["w2"]) + p["b2"])
    h = jax.nn.relu(dot(h, p["w3"]) + p["b3"])
    z = dot(h, p["w4"]) + p["b4"]
    return jax.nn.log_softmax(z, axis=-1)


if __name__ == "__main__":
    key = jax.random.PRNGKey(0)
    kx, kp = jax.random.split(key)

    batch = 10            # deliberately not a multiple of 8 — exercises padding
    input_size = 32
    hidden_size = 32
    num_classes = 16

    x = jax.random.normal(kx, (batch, input_size), jnp.float32)
    params = init_params(kp, input_size, hidden_size, num_classes)

    out = jax.block_until_ready(mlp_forward(x, params))
    assert out.shape == (batch, num_classes)

    # Same-recipe (bf16 matmuls, f32 accumulation) reference: tight match.
    ref_bf16 = mlp_reference(x, params, use_bf16=True)
    assert jnp.allclose(out, ref_bf16, atol=2e-3, rtol=2e-3)

    # Full-f32 reference: loose match (bf16 weight/activation rounding).
    ref_f32 = mlp_reference(x, params, use_bf16=False)
    assert jnp.allclose(out, ref_f32, atol=5e-2, rtol=0.0)

    # log_softmax rows normalize over the real (unpadded) classes.
    assert jnp.allclose(jnp.sum(jnp.exp(out), axis=-1), 1.0, atol=1e-4)

    print("KERNEL_OK")
</pallas_src>

<mosaic_0001>
module attributes {stable_mosaic.version = 11 : i64} {
  func.func @mlp_kernel(%arg0: i32, %arg1: memref<16x32xbf16, #tpu.memory_space<vmem>>, %arg2: memref<32x32xbf16, #tpu.memory_space<vmem>>, %arg3: memref<1x32xf32, #tpu.memory_space<vmem>>, %arg4: memref<32x32xbf16, #tpu.memory_space<vmem>>, %arg5: memref<1x32xf32, #tpu.memory_space<vmem>>, %arg6: memref<32x32xbf16, #tpu.memory_space<vmem>>, %arg7: memref<1x32xf32, #tpu.memory_space<vmem>>, %arg8: memref<32x128xbf16, #tpu.memory_space<vmem>>, %arg9: memref<1x128xf32, #tpu.memory_space<vmem>>, %arg10: memref<16x128xf32, #tpu.memory_space<vmem>>) attributes {dimension_semantics = [#tpu.dimension_semantics<parallel>], iteration_bounds = array<i64: 1>, scalar_prefetch = 0 : i64, scratch_operands = 0 : i64, tpu.core_type = #tpu.core_type<tc>, window_params = [{transform_indices = @transform_0, window_bounds = array<i64: 16, 32>}, {pipeline_mode = #tpu.pipeline_mode<synchronous>, transform_indices = @transform_1, window_bounds = array<i64: 32, 32>}, {pipeline_mode = #tpu.pipeline_mode<synchronous>, transform_indices = @transform_2, window_bounds = array<i64: 1, 32>}, {pipeline_mode = #tpu.pipeline_mode<synchronous>, transform_indices = @transform_3, window_bounds = array<i64: 32, 32>}, {pipeline_mode = #tpu.pipeline_mode<synchronous>, transform_indices = @transform_4, window_bounds = array<i64: 1, 32>}, {pipeline_mode = #tpu.pipeline_mode<synchronous>, transform_indices = @transform_5, window_bounds = array<i64: 32, 32>}, {pipeline_mode = #tpu.pipeline_mode<synchronous>, transform_indices = @transform_6, window_bounds = array<i64: 1, 32>}, {pipeline_mode = #tpu.pipeline_mode<synchronous>, transform_indices = @transform_7, window_bounds = array<i64: 32, 128>}, {pipeline_mode = #tpu.pipeline_mode<synchronous>, transform_indices = @transform_8, window_bounds = array<i64: 1, 128>}, {transform_indices = @transform_9, window_bounds = array<i64: 16, 128>}]} {
    %c0 = arith.constant 0 : index
    %c0_0 = arith.constant 0 : index
    %0 = vector.load %arg1[%c0, %c0_0] : memref<16x32xbf16, #tpu.memory_space<vmem>>, vector<16x32xbf16>
    %c0_1 = arith.constant 0 : index
    %c0_2 = arith.constant 0 : index
    %1 = vector.load %arg2[%c0_1, %c0_2] : memref<32x32xbf16, #tpu.memory_space<vmem>>, vector<32x32xbf16>
    %cst = arith.constant dense<0.000000e+00> : vector<16x32xf32>
    %2 = tpu.matmul %0, %1, %cst {dimension_numbers = #tpu.dot_dimension_numbers<[1], [0], [0], [1], [0, 0, 1, 1], [], []>} : vector<16x32xbf16>, vector<32x32xbf16>, vector<16x32xf32> -> vector<16x32xf32>
    %c0_3 = arith.constant 0 : index
    %c0_4 = arith.constant 0 : index
    %3 = vector.load %arg3[%c0_3, %c0_4] : memref<1x32xf32, #tpu.memory_space<vmem>>, vector<1x32xf32>
    %4 = vector.broadcast %3 : vector<1x32xf32> to vector<16x32xf32>
    %5 = arith.addf %2, %4 : vector<16x32xf32>
    %cst_5 = arith.constant 0.000000e+00 : f32
    %6 = vector.broadcast %cst_5 : f32 to vector<16x32xf32>
    %7 = arith.maximumf %5, %6 : vector<16x32xf32>
    %8 = arith.truncf %7 : vector<16x32xf32> to vector<16x32xbf16>
    %c0_6 = arith.constant 0 : index
    %c0_7 = arith.constant 0 : index
    %9 = vector.load %arg4[%c0_6, %c0_7] : memref<32x32xbf16, #tpu.memory_space<vmem>>, vector<32x32xbf16>
    %cst_8 = arith.constant dense<0.000000e+00> : vector<16x32xf32>
    %10 = tpu.matmul %8, %9, %cst_8 {dimension_numbers = #tpu.dot_dimension_numbers<[1], [0], [0], [1], [0, 0, 1, 1], [], []>} : vector<16x32xbf16>, vector<32x32xbf16>, vector<16x32xf32> -> vector<16x32xf32>
    %c0_9 = arith.constant 0 : index
    %c0_10 = arith.constant 0 : index
    %11 = vector.load %arg5[%c0_9, %c0_10] : memref<1x32xf32, #tpu.memory_space<vmem>>, vector<1x32xf32>
    %12 = vector.broadcast %11 : vector<1x32xf32> to vector<16x32xf32>
    %13 = arith.addf %10, %12 : vector<16x32xf32>
    %cst_11 = arith.constant 0.000000e+00 : f32
    %14 = vector.broadcast %cst_11 : f32 to vector<16x32xf32>
    %15 = arith.maximumf %13, %14 : vector<16x32xf32>
    %16 = arith.truncf %15 : vector<16x32xf32> to vector<16x32xbf16>
    %c0_12 = arith.constant 0 : index
    %c0_13 = arith.constant 0 : index
    %17 = vector.load %arg6[%c0_12, %c0_13] : memref<32x32xbf16, #tpu.memory_space<vmem>>, vector<32x32xbf16>
    %cst_14 = arith.constant dense<0.000000e+00> : vector<16x32xf32>
    %18 = tpu.matmul %16, %17, %cst_14 {dimension_numbers = #tpu.dot_dimension_numbers<[1], [0], [0], [1], [0, 0, 1, 1], [], []>} : vector<16x32xbf16>, vector<32x32xbf16>, vector<16x32xf32> -> vector<16x32xf32>
    %c0_15 = arith.constant 0 : index
    %c0_16 = arith.constant 0 : index
    %19 = vector.load %arg7[%c0_15, %c0_16] : memref<1x32xf32, #tpu.memory_space<vmem>>, vector<1x32xf32>
    %20 = vector.broadcast %19 : vector<1x32xf32> to vector<16x32xf32>
    %21 = arith.addf %18, %20 : vector<16x32xf32>
    %cst_17 = arith.constant 0.000000e+00 : f32
    %22 = vector.broadcast %cst_17 : f32 to vector<16x32xf32>
    %23 = arith.maximumf %21, %22 : vector<16x32xf32>
    %24 = arith.truncf %23 : vector<16x32xf32> to vector<16x32xbf16>
    %c0_18 = arith.constant 0 : index
    %c0_19 = arith.constant 0 : index
    %25 = vector.load %arg8[%c0_18, %c0_19] : memref<32x128xbf16, #tpu.memory_space<vmem>>, vector<32x128xbf16>
    %cst_20 = arith.constant dense<0.000000e+00> : vector<16x128xf32>
    %26 = tpu.matmul %24, %25, %cst_20 {dimension_numbers = #tpu.dot_dimension_numbers<[1], [0], [0], [1], [0, 0, 1, 1], [], []>} : vector<16x32xbf16>, vector<32x128xbf16>, vector<16x128xf32> -> vector<16x128xf32>
    %c0_21 = arith.constant 0 : index
    %c0_22 = arith.constant 0 : index
    %27 = vector.load %arg9[%c0_21, %c0_22] : memref<1x128xf32, #tpu.memory_space<vmem>>, vector<1x128xf32>
    %28 = vector.broadcast %27 : vector<1x128xf32> to vector<16x128xf32>
    %29 = arith.addf %26, %28 : vector<16x128xf32>
    %cst_23 = arith.constant dense<0xFF800000> : vector<16xf32>
    %30 = vector.multi_reduction <maximumf>, %29, %cst_23 [1] : vector<16x128xf32> to vector<16xf32>
    %31 = vector.shape_cast %30 : vector<16xf32> to vector<16x1xf32>
    %32 = vector.broadcast %31 : vector<16x1xf32> to vector<16x128xf32>
    %33 = arith.subf %29, %32 : vector<16x128xf32>
    %34 = math.exp %33 : vector<16x128xf32>
    %cst_24 = arith.constant dense<0.000000e+00> : vector<16xf32>
    %35 = vector.multi_reduction <add>, %34, %cst_24 [1] : vector<16x128xf32> to vector<16xf32>
    %36 = vector.shape_cast %35 : vector<16xf32> to vector<16x1xf32>
    %37 = math.log %36 : vector<16x1xf32>
    %38 = arith.addf %31, %37 : vector<16x1xf32>
    %39 = vector.broadcast %38 : vector<16x1xf32> to vector<16x128xf32>
    %40 = arith.subf %29, %39 : vector<16x128xf32>
    %c0_25 = arith.constant 0 : index
    %c0_26 = arith.constant 0 : index
    %41 = vector.load %arg10[%c0_25, %c0_26] : memref<16x128xf32, #tpu.memory_space<vmem>>, vector<16x128xf32>
    tpu.vector_store %arg10[%c0_25, %c0_26], %40 {strides = array<i32>} : memref<16x128xf32, #tpu.memory_space<vmem>>, vector<16x128xf32>,
    return
  }
  func.func @transform_0(%arg0: i32) -> (i32, i32) {
    %c0_i32 = arith.constant 0 : i32
    %c0_i32_0 = arith.constant 0 : i32
    return %arg0, %c0_i32 : i32, i32
  }
  func.func @transform_1(%arg0: i32) -> (i32, i32) {
    %c0_i32 = arith.constant 0 : i32
    %c0_i32_0 = arith.constant 0 : i32
    %c0_i32_1 = arith.constant 0 : i32
    return %c0_i32, %c0_i32_0 : i32, i32
  }
  func.func @transform_2(%arg0: i32) -> (i32, i32) {
    %c0_i32 = arith.constant 0 : i32
    %c0_i32_0 = arith.constant 0 : i32
    %c0_i32_1 = arith.constant 0 : i32
    return %c0_i32, %c0_i32_0 : i32, i32
  }
  func.func @transform_3(%arg0: i32) -> (i32, i32) {
    %c0_i32 = arith.constant 0 : i32
    %c0_i32_0 = arith.constant 0 : i32
    %c0_i32_1 = arith.constant 0 : i32
    return %c0_i32, %c0_i32_0 : i32, i32
  }
  func.func @transform_4(%arg0: i32) -> (i32, i32) {
    %c0_i32 = arith.constant 0 : i32
    %c0_i32_0 = arith.constant 0 : i32
    %c0_i32_1 = arith.constant 0 : i32
    return %c0_i32, %c0_i32_0 : i32, i32
  }
  func.func @transform_5(%arg0: i32) -> (i32, i32) {
    %c0_i32 = arith.constant 0 : i32
    %c0_i32_0 = arith.constant 0 : i32
    %c0_i32_1 = arith.constant 0 : i32
    return %c0_i32, %c0_i32_0 : i32, i32
  }
  func.func @transform_6(%arg0: i32) -> (i32, i32) {
    %c0_i32 = arith.constant 0 : i32
    %c0_i32_0 = arith.constant 0 : i32
    %c0_i32_1 = arith.constant 0 : i32
    return %c0_i32, %c0_i32_0 : i32, i32
  }
  func.func @transform_7(%arg0: i32) -> (i32, i32) {
    %c0_i32 = arith.constant 0 : i32
    %c0_i32_0 = arith.constant 0 : i32
    %c0_i32_1 = arith.constant 0 : i32
    return %c0_i32, %c0_i32_0 : i32, i32
  }
  func.func @transform_8(%arg0: i32) -> (i32, i32) {
    %c0_i32 = arith.constant 0 : i32
    %c0_i32_0 = arith.constant 0 : i32
    %c0_i32_1 = arith.constant 0 : i32
    return %c0_i32, %c0_i32_0 : i32, i32
  }
  func.func @transform_9(%arg0: i32) -> (i32, i32) {
    %c0_i32 = arith.constant 0 : i32
    %c0_i32_0 = arith.constant 0 : i32
    return %arg0, %c0_i32 : i32, i32
  }
}

</mosaic_0001>

<llo_original>
// kernel: tpu_custom_call.1
$region0: #{tpu_custom_call.1}
  #allocation0 [shape = 'u32[]', space=smem, size = 0x4, offset = 0x4, fixed_abs, tag = 'smem constant byte address 0x4 - core index']
  #allocation1 [shape = 'u32[144,128]{1,0:T(1,128)}', space=vmem, size = 0x12000, scoped, tag = 'internal scratch']
  %s0 = inlined_call_operand.hbm [shape: bf16[16,32], index: 0, kind: input, shape index: {}]
  %s1 = inlined_call_operand.hbm [shape: bf16[32,32], index: 1, kind: input, shape index: {}]
  %s2 = inlined_call_operand.vmem [shape: f32[1,32], index: 2, kind: input, shape index: {}]
  %s3 = inlined_call_operand.hbm [shape: bf16[32,32], index: 3, kind: input, shape index: {}]
  %s4 = inlined_call_operand.vmem [shape: f32[1,32], index: 4, kind: input, shape index: {}]
  %s5 = inlined_call_operand.vmem [shape: bf16[32,32], index: 5, kind: input, shape index: {}]
  %s6 = inlined_call_operand.vmem [shape: f32[1,32], index: 6, kind: input, shape index: {}]
  %s7 = inlined_call_operand.hbm [shape: bf16[32,128], index: 7, kind: input, shape index: {}]
  %s8 = inlined_call_operand.vmem [shape: f32[1,128], index: 8, kind: input, shape index: {}]
  %s9 = inlined_call_operand.hbm [shape: f32[16,128], index: 9, kind: output, shape index: {}]
  %s10 = sld [smem:[#allocation0]]
  $region62: #{tpu_custom_call.1} parent=0
    _
  %s12 = ssub.s32 1, %s10
  %s13 = scalar_select 0, %s12, %s10
  $region1: #{tpu_custom_call.1} parent=0
    #allocation2 [shape = 'u8[4096]{0}', space=vmem, size = 0x1000, scoped, tag = 'input window, operand 0, single buffered']
    #allocation3 [shape = 's32[1]{0}', space=sflag, size = 0x4, scoped, tag = 'scoped memory for tpu_custom_call.1']
    #allocation4 [shape = 's32[1]{0}', space=sflag, size = 0x4, scoped, tag = 'scoped memory for tpu_custom_call.1']
    #allocation5 [shape = 'u8[8192]{0}', space=vmem, size = 0x2000, scoped, tag = 'input window, operand 1, single buffered']
    #allocation6 [shape = 's32[1]{0}', space=sflag, size = 0x4, scoped, tag = 'scoped memory for tpu_custom_call.1']
    #allocation7 [shape = 'u8[8192]{0}', space=vmem, size = 0x2000, scoped, tag = 'input window, operand 3, single buffered']
    #allocation8 [shape = 'u8[8192]{0}', space=vmem, size = 0x2000, scoped, tag = 'input window, operand 7, single buffered']
    #allocation9 [shape = 's32[1]{0}', space=sflag, size = 0x4, scoped, tag = 'scoped memory for tpu_custom_call.1']
    #allocation10 [shape = 'u8[8192]{0}', space=vmem, size = 0x2000, scoped, tag = 'output window, operand 0, single buffered']
    %14 = vsyncpa [#allocation3], 0
    %15 = vsyncpa [#allocation6], 0
    %16 = vsyncpa [#allocation9], 0
    %17 = vsyncpa [#allocation4], 0
    // Predicated region
    $region2: #{tpu_custom_call.1} parent=1 // pred_check
      _
    $region3: #{tpu_custom_call.1} parent=1 // pred_check_branch
      %19 = sbr.rel (0) target = $region5
    $region4: #{tpu_custom_call.1} parent=1 // pred_region
      %s21 = ssub.s32 128, 128
      %22 = vsyncadd [#allocation3], %s21
      %s23 = sshll.u32 [#allocation2], 4
      %s24 = int_to_ptr.vmem [resolvable:$true] %s23
      %29 = dma.hbm_to_vmem [thread:$0]  %s0, 128, %s24, [#allocation3], 64, 64, 4
    $region5: #{tpu_custom_call.1} parent=1 // pred_fallthru
      _
    // Predicated region
    $region6: #{tpu_custom_call.1} parent=1 // pred_check
      _
    $region7: #{tpu_custom_call.1} parent=1 // pred_check_branch
      %31 = sbr.rel (0) target = $region9
    $region8: #{tpu_custom_call.1} parent=1 // pred_region
      %s33 = ssub.s32 256, 256
      %34 = vsyncadd [#allocation6], %s33
      %s35 = sshll.u32 [#allocation5], 4
      %s36 = int_to_ptr.vmem [resolvable:$true] %s35
      %41 = dma.hbm_to_vmem [thread:$0]  %s1, 256, %s36, [#allocation6], 64, 64, 4
    $region9: #{tpu_custom_call.1} parent=1 // pred_fallthru
      _
    // Predicated region
    $region10: #{tpu_custom_call.1} parent=1 // pred_check
      _
    $region11: #{tpu_custom_call.1} parent=1 // pred_check_branch
      %43 = sbr.rel (0) target = $region13
    $region12: #{tpu_custom_call.1} parent=1 // pred_region
      _
    $region13: #{tpu_custom_call.1} parent=1 // pred_fallthru
      _
    // Predicated region
    $region14: #{tpu_custom_call.1} parent=1 // pred_check
      _
    $region15: #{tpu_custom_call.1} parent=1 // pred_check_branch
      %45 = sbr.rel (0) target = $region17
    $region16: #{tpu_custom_call.1} parent=1 // pred_region
      %s47 = ssub.s32 256, 256
      %48 = vsyncadd [#allocation6], %s47
      %s49 = sshll.u32 [#allocation7], 4
      %s50 = int_to_ptr.vmem [resolvable:$true] %s49
      %55 = dma.hbm_to_vmem [thread:$0]  %s3, 256, %s50, [#allocation6], 64, 64, 4
    $region17: #{tpu_custom_call.1} parent=1 // pred_fallthru
      _
    // Predicated region
    $region18: #{tpu_custom_call.1} parent=1 // pred_check
      _
    $region19: #{tpu_custom_call.1} parent=1 // pred_check_branch
      %57 = sbr.rel (0) target = $region21
    $region20: #{tpu_custom_call.1} parent=1 // pred_region
      _
    $region21: #{tpu_custom_call.1} parent=1 // pred_fallthru
      _
    // Predicated region
    $region22: #{tpu_custom_call.1} parent=1 // pred_check
      _
    $region23: #{tpu_custom_call.1} parent=1 // pred_check_branch
      %59 = sbr.rel (0) target = $region25
    $region24: #{tpu_custom_call.1} parent=1 // pred_region
      _
    $region25: #{tpu_custom_call.1} parent=1 // pred_fallthru
      _
    // Predicated region
    $region26: #{tpu_custom_call.1} parent=1 // pred_check
      _
    $region27: #{tpu_custom_call.1} parent=1 // pred_check_branch
      %61 = sbr.rel (0) target = $region29
    $region28: #{tpu_custom_call.1} parent=1 // pred_region
      _
    $region29: #{tpu_custom_call.1} parent=1 // pred_fallthru
      _
    // Predicated region
    $region30: #{tpu_custom_call.1} parent=1 // pred_check
      _
    $region31: #{tpu_custom_call.1} parent=1 // pred_check_branch
      %63 = sbr.rel (0) target = $region33
    $region32: #{tpu_custom_call.1} parent=1 // pred_region
      %s65 = ssub.s32 256, 256
      %66 = vsyncadd [#allocation9], %s65
      %s67 = sshll.u32 [#allocation8], 4
      %s68 = int_to_ptr.vmem [resolvable:$true] %s67
      %73 = dma.hbm_to_vmem [thread:$0]  %s7, 256, %s68, [#allocation9], 64, 64, 4
    $region33: #{tpu_custom_call.1} parent=1 // pred_fallthru
      _
    // Predicated region
    $region34: #{tpu_custom_call.1} parent=1 // pred_check
      _
    $region35: #{tpu_custom_call.1} parent=1 // pred_check_branch
      %75 = sbr.rel (0) target = $region37
    $region36: #{tpu_custom_call.1} parent=1 // pred_region
      _
    $region37: #{tpu_custom_call.1} parent=1 // pred_fallthru
      _
    // Predicated region
    $region38: #{tpu_custom_call.1} parent=1 // pred_check
      _
    $region39: #{tpu_custom_call.1} parent=1 // pred_check_branch
      %77 = sbr.rel (0) target = $region41
    $region40: #{tpu_custom_call.1} parent=1 // pred_region
      %78 = dma.done [#allocation3], 128
    $region41: #{tpu_custom_call.1} parent=1 // pred_fallthru
      _
    // Predicated region
    $region42: #{tpu_custom_call.1} parent=1 // pred_check
      _
    $region43: #{tpu_custom_call.1} parent=1 // pred_check_branch
      %80 = sbr.rel (0) target = $region45
    $region44: #{tpu_custom_call.1} parent=1 // pred_region
      %81 = dma.done [#allocation6], 256
    $region45: #{tpu_custom_call.1} parent=1 // pred_fallthru
      _
    // Predicated region
    $region46: #{tpu_custom_call.1} parent=1 // pred_check
      _
    $region47: #{tpu_custom_call.1} parent=1 // pred_check_branch
      %83 = sbr.rel (0) target = $region49
    $region48: #{tpu_custom_call.1} parent=1 // pred_region
      %84 = dma.done [#allocation6], 256
    $region49: #{tpu_custom_call.1} parent=1 // pred_fallthru
      _
    // Predicated region
    $region50: #{tpu_custom_call.1} parent=1 // pred_check
      _
    $region51: #{tpu_custom_call.1} parent=1 // pred_check_branch
      %86 = sbr.rel (0) target = $region53
    $region52: #{tpu_custom_call.1} parent=1 // pred_region
      %87 = dma.done [#allocation9], 256
    $region53: #{tpu_custom_call.1} parent=1 // pred_fallthru
      _
    %v89 = vld [vmem:[#allocation2] sm:$0xf]
    %v90 = vld [vmem:[#allocation2 + $0x4] sm:$0xf]
    %v91 = vld [vmem:[#allocation5] sm:$0xf]
    %v92 = vld [vmem:[#allocation5 + $0x4] sm:$0xf]
    %v93 = vld [vmem:[#allocation5 + $0x8] sm:$0xf]
    %v94 = vld [vmem:[#allocation5 + $0xc] sm:$0xf]
    %v95 = vld [vmem:[%s2] sm:$0x1]
    %v97 = vlaneseq
    %v98 = vshrl.u32 %v97, 7
    %v99 = vsub.s32 0, %v98
    %v100 = vrot.slane %v95, %v99
    %v104 = vunpack.c.l.b16 %v89
    %v105 = vunpack.c.l.b16 %v90
    %v106 = vpack.c.b16 %v105, %v104
    %v111 = vunpack.c.l.b16 %v91
    %v112 = vunpack.c.l.b16 %v92
    %v113 = vunpack.c.l.b16 %v93
    %v114 = vunpack.c.l.b16 %v94
    %v115 = vpack.c.b16 %v112, %v111
    %v116 = vpack.c.b16 %v114, %v113
    %vm119 = vcmask 261120
    %v121 = vsel %vm119, %v106, 0
    %123 = vmatprep.subr.bf16.mxu0 0
    %124 = vmatpush1.bf16.msra.mxu0 %v115
    %125 = vmatprep.subr.bf16.mxu0 0
    %126 = vmatpush1.bf16.msra.mxu0 %v116
    %127 = vmatprep.subr.bf16.mxu0 0
    %128 = vmatpush1.bf16.msra.mxu0 0
    %129 = vmatprep.subr.bf16.mxu0 0
    %130 = vmatpush1.bf16.msra.mxu0 0
    %131 = vmatprep.subr.bf16.mxu0 0
    %132 = vmatpush1.bf16.msra.mxu0 0
    %133 = vmatprep.subr.bf16.mxu0 0
    %134 = vmatpush1.bf16.msra.mxu0 0
    %135 = vmatprep.subr.bf16.mxu0 0
    %136 = vmatpush1.bf16.msra.mxu0 0
    %137 = vmatprep.subr.bf16.mxu0 0
    %138 = vmatpush1.bf16.msra.mxu0 0
    %139 = vmatprep.subr.bf16.mxu0 0
    %140 = vmatpush1.bf16.msra.mxu0 0
    %141 = vmatprep.subr.bf16.mxu0 0
    %142 = vmatpush1.bf16.msra.mxu0 0
    %143 = vmatprep.subr.bf16.mxu0 0
    %144 = vmatpush1.bf16.msra.mxu0 0
    %145 = vmatprep.subr.bf16.mxu0 0
    %146 = vmatpush1.bf16.msra.mxu0 0
    %147 = vmatprep.subr.bf16.mxu0 0
    %148 = vmatpush1.bf16.msra.mxu0 0
    %149 = vmatprep.subr.bf16.mxu0 0
    %150 = vmatpush1.bf16.msra.mxu0 0
    %151 = vmatprep.subr.bf16.mxu0 0
    %152 = vmatpush1.bf16.msra.mxu0 0
    %153 = vmatprep.subr.bf16.mxu0 0
    %154 = vmatpush1.bf16.msra.mxu0 0
    %155 = vmatprep.mubr.bf16.mxu0 0
    %156 = vmatmul.mubr.bf16.gmra.mrb[0].mxu0 %v121
    %v157 = vpop.f32.mrb[0].mxu0
    %v158 = vadd.f32 %v100, %v157
    %v159 = vpop.f32.mrb[0].mxu0
    %v160 = vpop.f32.mrb[0].mxu0
    %v161 = vadd.f32 %v100, %v160
    %v162 = vpop.f32.mrb[0].mxu0
    %163 = vdwg.mxu0
    %v164 = vmax.f32 %v158, 0.0
    %v165 = vmax.f32 %v161, 0.0
    %v166 = vpack.c.bf16 %v165, %v164
    %v167 = vld [vmem:[#allocation7] sm:$0xf]
    %v168 = vld [vmem:[#allocation7 + $0x4] sm:$0xf]
    %v169 = vld [vmem:[#allocation7 + $0x8] sm:$0xf]
    %v170 = vld [vmem:[#allocation7 + $0xc] sm:$0xf]
    %v171 = vld [vmem:[%s4] sm:$0x1]
    %v173 = vlaneseq
    %v174 = vshrl.u32 %v173, 7
    %v175 = vsub.s32 0, %v174
    %v176 = vrot.slane %v171, %v175
    %v182 = vunpack.c.l.b16 %v167
    %v183 = vunpack.c.l.b16 %v168
    %v184 = vunpack.c.l.b16 %v169
    %v185 = vunpack.c.l.b16 %v170
    %v186 = vpack.c.b16 %v183, %v182
    %v187 = vpack.c.b16 %v185, %v184
    %v191 = vsel %vm119, %v166, 0
    %193 = vmatprep.subr.bf16.mxu0 0
    %194 = vmatpush1.bf16.msra.mxu0 %v186
    %195 = vmatprep.subr.bf16.mxu0 0
    %196 = vmatpush1.bf16.msra.mxu0 %v187
    %197 = vmatprep.subr.bf16.mxu0 0
    %198 = vmatpush1.bf16.msra.mxu0 0
    %199 = vmatprep.subr.bf16.mxu0 0
    %200 = vmatpush1.bf16.msra.mxu0 0
    %201 = vmatprep.subr.bf16.mxu0 0
    %202 = vmatpush1.bf16.msra.mxu0 0
    %203 = vmatprep.subr.bf16.mxu0 0
    %204 = vmatpush1.bf16.msra.mxu0 0
    %205 = vmatprep.subr.bf16.mxu0 0
    %206 = vmatpush1.bf16.msra.mxu0 0
    %207 = vmatprep.subr.bf16.mxu0 0
    %208 = vmatpush1.bf16.msra.mxu0 0
    %209 = vmatprep.subr.bf16.mxu0 0
    %210 = vmatpush1.bf16.msra.mxu0 0
    %211 = vmatprep.subr.bf16.mxu0 0
    %212 = vmatpush1.bf16.msra.mxu0 0
    %213 = vmatprep.subr.bf16.mxu0 0
    %214 = vmatpush1.bf16.msra.mxu0 0
    %215 = vmatprep.subr.bf16.mxu0 0
    %216 = vmatpush1.bf16.msra.mxu0 0
    %217 = vmatprep.subr.bf16.mxu0 0
    %218 = vmatpush1.bf16.msra.mxu0 0
    %219 = vmatprep.subr.bf16.mxu0 0
    %220 = vmatpush1.bf16.msra.mxu0 0
    %221 = vmatprep.subr.bf16.mxu0 0
    %222 = vmatpush1.bf16.msra.mxu0 0
    %223 = vmatprep.subr.bf16.mxu0 0
    %224 = vmatpush1.bf16.msra.mxu0 0
    %225 = vmatprep.mubr.bf16.mxu0 0
    %226 = vmatmul.mubr.bf16.gmra.mrb[0].mxu0 %v191
    %v227 = vpop.f32.mrb[0].mxu0
    %v228 = vadd.f32 %v176, %v227
    %v229 = vpop.f32.mrb[0].mxu0
    %v230 = vpop.f32.mrb[0].mxu0
    %v231 = vadd.f32 %v176, %v230
    %v232 = vpop.f32.mrb[0].mxu0
    %233 = vdwg.mxu0
    %v234 = vmax.f32 %v228, 0.0
    %v235 = vmax.f32 %v231, 0.0
    %v236 = vpack.c.bf16 %v235, %v234
    %v237 = vld [vmem:[%s5] sm:$0xf]
    %v238 = vld [vmem:[%s5 + $0x4] sm:$0xf]
    %v239 = vld [vmem:[%s5 + $0x8] sm:$0xf]
    %v240 = vld [vmem:[%s5 + $0xc] sm:$0xf]
    %v241 = vld [vmem:[%s6] sm:$0x1]
    %v243 = vlaneseq
    %v244 = vshrl.u32 %v243, 7
    %v245 = vsub.s32 0, %v244
    %v246 = vrot.slane %v241, %v245
    %v252 = vunpack.c.l.b16 %v237
    %v253 = vunpack.c.l.b16 %v238
    %v254 = vunpack.c.l.b16 %v239
    %v255 = vunpack.c.l.b16 %v240
    %v256 = vpack.c.b16 %v253, %v252
    %v257 = vpack.c.b16 %v255, %v254
    %v261 = vsel %vm119, %v236, 0
    %263 = vmatprep.subr.bf16.mxu0 0
    %264 = vmatpush1.bf16.msra.mxu0 %v256
    %265 = vmatprep.subr.bf16.mxu0 0
    %266 = vmatpush1.bf16.msra.mxu0 %v257
    %267 = vmatprep.subr.bf16.mxu0 0
    %268 = vmatpush1.bf16.msra.mxu0 0
    %269 = vmatprep.subr.bf16.mxu0 0
    %270 = vmatpush1.bf16.msra.mxu0 0
    %271 = vmatprep.subr.bf16.mxu0 0
    %272 = vmatpush1.bf16.msra.mxu0 0
    %273 = vmatprep.subr.bf16.mxu0 0
    %274 = vmatpush1.bf16.msra.mxu0 0
    %275 = vmatprep.subr.bf16.mxu0 0
    %276 = vmatpush1.bf16.msra.mxu0 0
    %277 = vmatprep.subr.bf16.mxu0 0
    %278 = vmatpush1.bf16.msra.mxu0 0
    %279 = vmatprep.subr.bf16.mxu0 0
    %280 = vmatpush1.bf16.msra.mxu0 0
    %281 = vmatprep.subr.bf16.mxu0 0
    %282 = vmatpush1.bf16.msra.mxu0 0
    %283 = vmatprep.subr.bf16.mxu0 0
    %284 = vmatpush1.bf16.msra.mxu0 0
    %285 = vmatprep.subr.bf16.mxu0 0
    %286 = vmatpush1.bf16.msra.mxu0 0
    %287 = vmatprep.subr.bf16.mxu0 0
    %288 = vmatpush1.bf16.msra.mxu0 0
    %289 = vmatprep.subr.bf16.mxu0 0
    %290 = vmatpush1.bf16.msra.mxu0 0
    %291 = vmatprep.subr.bf16.mxu0 0
    %292 = vmatpush1.bf16.msra.mxu0 0
    %293 = vmatprep.subr.bf16.mxu0 0
    %294 = vmatpush1.bf16.msra.mxu0 0
    %295 = vmatprep.mubr.bf16.mxu0 0
    %296 = vmatmul.mubr.bf16.gmra.mrb[0].mxu0 %v261
    %v297 = vpop.f32.mrb[0].mxu0
    %v298 = vadd.f32 %v246, %v297
    %v299 = vpop.f32.mrb[0].mxu0
    %v300 = vpop.f32.mrb[0].mxu0
    %v301 = vadd.f32 %v246, %v300
    %v302 = vpop.f32.mrb[0].mxu0
    %303 = vdwg.mxu0
    %v304 = vmax.f32 %v298, 0.0
    %v305 = vmax.f32 %v301, 0.0
    %v306 = vpack.c.bf16 %v305, %v304
    %v307 = vld [vmem:[#allocation8] sm:$0xf]
    %v308 = vld [vmem:[#allocation8 + $0x4] sm:$0xf]
    %v309 = vld [vmem:[#allocation8 + $0x8] sm:$0xf]
    %v310 = vld [vmem:[#allocation8 + $0xc] sm:$0xf]
    %v311 = vld [vmem:[%s8] sm:$0x1]
    %v313 = vlaneseq
    %v314 = vshrl.u32 %v313, 7
    %v315 = vsub.s32 0, %v314
    %v316 = vrot.slane %v311, %v315
    %v322 = vunpack.c.l.b16 %v307
    %v323 = vunpack.c.l.b16 %v308
    %v324 = vunpack.c.l.b16 %v309
    %v325 = vunpack.c.l.b16 %v310
    %v326 = vpack.c.b16 %v323, %v322
    %v327 = vpack.c.b16 %v325, %v324
    %v331 = vsel %vm119, %v306, 0
    %333 = vmatprep.subr.bf16.mxu0 0
    %334 = vmatpush1.bf16.msra.mxu0 %v326
    %335 = vmatprep.subr.bf16.mxu0 0
    %336 = vmatpush1.bf16.msra.mxu0 %v327
    %337 = vmatprep.subr.bf16.mxu0 0
    %338 = vmatpush1.bf16.msra.mxu0 0
    %339 = vmatprep.subr.bf16.mxu0 0
    %340 = vmatpush1.bf16.msra.mxu0 0
    %341 = vmatprep.subr.bf16.mxu0 0
    %342 = vmatpush1.bf16.msra.mxu0 0
    %343 = vmatprep.subr.bf16.mxu0 0
    %344 = vmatpush1.bf16.msra.mxu0 0
    %345 = vmatprep.subr.bf16.mxu0 0
    %346 = vmatpush1.bf16.msra.mxu0 0
    %347 = vmatprep.subr.bf16.mxu0 0
    %348 = vmatpush1.bf16.msra.mxu0 0
    %349 = vmatprep.subr.bf16.mxu0 0
    %350 = vmatpush1.bf16.msra.mxu0 0
    %351 = vmatprep.subr.bf16.mxu0 0
    %352 = vmatpush1.bf16.msra.mxu0 0
    %353 = vmatprep.subr.bf16.mxu0 0
    %354 = vmatpush1.bf16.msra.mxu0 0
    %355 = vmatprep.subr.bf16.mxu0 0
    %356 = vmatpush1.bf16.msra.mxu0 0
    %357 = vmatprep.subr.bf16.mxu0 0
    %358 = vmatpush1.bf16.msra.mxu0 0
    %359 = vmatprep.subr.bf16.mxu0 0
    %360 = vmatpush1.bf16.msra.mxu0 0
    %361 = vmatprep.subr.bf16.mxu0 0
    %362 = vmatpush1.bf16.msra.mxu0 0
    %363 = vmatprep.subr.bf16.mxu0 0
    %364 = vmatpush1.bf16.msra.mxu0 0
    %365 = vmatprep.mubr.bf16.mxu0 0
    %366 = vmatmul.mubr.bf16.gmra.mrb[0].mxu0 %v331
    %v367 = vpop.f32.mrb[0].mxu0
    %v368 = vadd.f32 %v316, %v367
    %v369 = vpop.f32.mrb[0].mxu0
    %v370 = vpop.f32.mrb[0].mxu0
    %v371 = vadd.f32 %v316, %v370
    %v372 = vpop.f32.mrb[0].mxu0
    %373 = vdwg.mxu0
    %374 = vmax.xlane.f32.xlu0 %v368
    %v375 = vpop.xlane.xlu0 %374
    %376 = vmax.xlane.f32.xlu0 %v371
    %v377 = vpop.xlane.xlu0 %376
    %v378 = vsub.f32 %v368, %v375
    %v379 = vsub.f32 %v371, %v377
    %v380 = vmul.f32 %v378, 1.442695
    %v381 = vpow.pop %v380
    %v382 = vmul.f32 %v379, 1.442695
    %v383 = vpow.pop %v382
    %384 = vadd.xlane.f32.xlu0 %v381
    %v385 = vpop.xlane.xlu0 %384
    %386 = vadd.xlane.f32.xlu0 %v383
    %v387 = vpop.xlane.xlu0 %386
    %v388 = vlog2.pop %v385
    %v389 = vmul.f32 %v388, 0.6931472
    %v390 = vlog2.pop %v387
    %v391 = vmul.f32 %v390, 0.6931472
    %v392 = vadd.f32 %v375, %v389
    %v393 = vadd.f32 %v377, %v391
    %v394 = vsub.f32 %v368, %v392
    %v395 = vsub.f32 %v371, %v393
    %396 = vst [vmem:[#allocation10] sm:$0xff] %v394
    %397 = vst [vmem:[#allocation10 + $0x8] sm:$0xff] %v395
    // Predicated region
    $region54: #{tpu_custom_call.1} parent=1 // pred_check
      _
    $region55: #{tpu_custom_call.1} parent=1 // pred_check_branch
      %399 = sbr.rel (0) target = $region57
    $region56: #{tpu_custom_call.1} parent=1 // pred_region
      %s401 = ssub.s32 256, 256
      %402 = vsyncadd [#allocation4], %s401
      %s403 = sshll.u32 [#allocation10], 4
      %s404 = int_to_ptr.vmem [resolvable:$true] %s403
      %409 = dma.vmem_to_hbm [thread:$0]  %s404, 256, %s9, [#allocation4], 128, 128, 8
    $region57: #{tpu_custom_call.1} parent=1 // pred_fallthru
      _
    // Predicated region
    $region58: #{tpu_custom_call.1} parent=1 // pred_check
      _
    $region59: #{tpu_custom_call.1} parent=1 // pred_check_branch
      %411 = sbr.rel (0) target = $region61
    $region60: #{tpu_custom_call.1} parent=1 // pred_region
      %412 = dma.done [#allocation4], 256
    $region61: #{tpu_custom_call.1} parent=1 // pred_fallthru
      _
    %413 = vsyncpa [#allocation3], 1
    %414 = vsyncpa [#allocation6], 1
    %415 = vsyncpa [#allocation9], 1
    %416 = vsyncpa [#allocation4], 1

</llo_original>
